<compile_context>
chip_gen: v5e
topology: v5e:2x2
jax: 0.10.0
libtpu: 0.0.40
codegen_flags: <defaults>
</compile_context>

<pallas_src>
import jax
import jax.numpy as jnp
from jax import lax
from jax.experimental import pallas as pl
from jax.experimental.pallas import tpu as pltpu


def ffn_kernel(x_ref, w1_ref, b1_ref, w2_ref, b2_ref, o_ref, acc_ref):
    # x_ref : (tm, D)   token tile
    # w1_ref: (th, D)   dense1 weight chunk, PyTorch (out, in) layout
    # b1_ref: (1, th)   dense1 bias chunk
    # w2_ref: (D, th)   dense2 weight chunk, PyTorch (out, in) layout
    # b2_ref: (1, D)    dense2 bias
    # o_ref : (tm, D)   output tile (block index constant across the H axis)
    # acc_ref:(tm, D)   f32 accumulator scratch
    h_idx = pl.program_id(1)

    @pl.when(h_idx == 0)
    def _():
        acc_ref[...] = jnp.zeros_like(acc_ref)

    x = x_ref[...]
    # dense1 partial: contract last dims of both operands (== x @ w1_chunk.T), f32 acc on MXU.
    pre = lax.dot_general(x, w1_ref[...], (((1,), (1,)), ((), ())),
                          preferred_element_type=jnp.float32)
    hid = jnp.maximum(pre + b1_ref[...].astype(jnp.float32), 0.0)
    # dense2 partial: contract the hidden chunk (== hid @ w2_chunk.T), accumulate in f32.
    acc_ref[...] += lax.dot_general(hid.astype(w2_ref.dtype), w2_ref[...],
                                    (((1,), (1,)), ((), ())),
                                    preferred_element_type=jnp.float32)

    @pl.when(h_idx == pl.num_programs(1) - 1)
    def _():
        o_ref[...] = (acc_ref[...] + b2_ref[...].astype(jnp.float32)).astype(o_ref.dtype)


def _vmem_estimate(tm, th, D, x_bytes, w_bytes):
    est = 2 * tm * D * x_bytes          # activation tiles (double-buffered)
    est += 2 * th * D * w_bytes         # w1 tiles
    est += 2 * D * th * w_bytes         # w2 tiles
    est += 2 * th * w_bytes             # b1 tiles
    est += 2 * D * w_bytes              # b2
    est += 2 * tm * D * x_bytes         # output tiles
    est += tm * D * 4                   # f32 accumulator scratch
    est += 2 * tm * th * 4              # f32 hidden intermediate (vreg/spill headroom)
    return est


def _choose_tm(M, block_m):
    """MXU-aligned token tile; for small M split into >=2 tiles so both v7x cores work."""
    if M >= 2 * block_m:
        return block_m
    half = (((M + 1) // 2 + 7) // 8) * 8
    if 8 <= half < M:
        return half
    return M                             # tiny M: single full-extent block (always legal)


def _choose_th(H, D, tm, x_bytes, w_bytes, budget):
    """Largest multiple-of-128 divisor of H (<=512) whose working set fits the budget."""
    if H % 128 != 0:
        return H                         # reduction axis must tile exactly
    th = (min(H, 512) // 128) * 128
    while th > 128:
        if H % th == 0 and _vmem_estimate(tm, th, D, x_bytes, w_bytes) <= budget:
            return th
        th -= 128
    return 128


def position_wise_ffn(X, w1, b1, w2, b2, *, block_m=256):
    """X: (..., D). w1: (H, D), b1: (H,), w2: (D, H), b2: (D,)  (PyTorch nn.Linear layout).
    Returns relu(X @ w1.T + b1) @ w2.T + b2, same leading shape/dtype as X."""
    orig_shape = X.shape
    D = orig_shape[-1]
    H = w1.shape[0]
    M = 1
    for s in orig_shape[:-1]:
        M *= s

    xf = X.reshape(M, D)                 # row-major flatten: no transpose, no extra HBM pass
    b1r = b1.reshape(1, H)
    b2r = b2.reshape(1, D)

    x_bytes = jnp.dtype(X.dtype).itemsize
    w_bytes = jnp.dtype(w1.dtype).itemsize

    try:
        vmem_cap = int(pltpu.get_tpu_info().vmem_capacity_bytes)
    except Exception:
        vmem_cap = 64 * 1024 * 1024      # conservative (v7x per-TensorCore) fallback

    tm = _choose_tm(M, block_m)
    th = _choose_th(H, D, tm, x_bytes, w_bytes, budget=vmem_cap // 2)

    grid = (pl.cdiv(M, tm), H // th)     # th divides H by construction

    # Explicit scoped-VMEM limit: above the 16/32 MiB defaults, below physical on all gens.
    vmem_limit = max(32 * 1024 * 1024, min(int(0.85 * vmem_cap), 100 * 1024 * 1024))

    grid_m = grid[0]
    flops = 4 * M * D * H                # two matmuls: 2*M*D*H each
    bytes_accessed = (
        M * D * x_bytes                  # activations read
        + M * D * x_bytes                # output written (same dtype as input)
        + grid_m * 2 * H * D * w_bytes   # w1 + w2 streamed once per M tile
        + grid_m * (H + D) * w_bytes     # biases streamed once per M tile
    )

    out_flat = pl.pallas_call(
        ffn_kernel,
        out_shape=jax.ShapeDtypeStruct((M, D), X.dtype),
        grid_spec=pltpu.PrefetchScalarGridSpec(
            num_scalar_prefetch=0,
            grid=grid,
            in_specs=[
                pl.BlockSpec((tm, D), lambda i, h: (i, 0)),   # activations: tiled over M
                pl.BlockSpec((th, D), lambda i, h: (h, 0)),   # dense1 weight: streamed over H
                pl.BlockSpec((1, th), lambda i, h: (0, h)),   # dense1 bias chunk
                pl.BlockSpec((D, th), lambda i, h: (0, h)),   # dense2 weight: streamed over H
                pl.BlockSpec((1, D),  lambda i, h: (0, 0)),   # dense2 bias (grid-constant, tiny)
            ],
            out_specs=pl.BlockSpec((tm, D), lambda i, h: (i, 0)),
            scratch_shapes=[pltpu.VMEM((tm, D), jnp.float32)],
        ),
        compiler_params=pltpu.CompilerParams(
            dimension_semantics=("parallel", "arbitrary"),    # M parallel, H is a reduction
            vmem_limit_bytes=vmem_limit,
        ),
        cost_estimate=pl.CostEstimate(
            flops=flops, transcendentals=0, bytes_accessed=bytes_accessed),
    )(xf, w1, b1r, w2, b2r)

    return out_flat.reshape(orig_shape[:-1] + (D,))


def reference(X, w1, b1, w2, b2):
    """Pure-JAX reference of the PyTorch forward: dense2(relu(dense1(X)))."""
    h = jnp.maximum(jnp.einsum('...d,hd->...h', X, w1) + b1, 0.0)
    return jnp.einsum('...h,dh->...d', h, w2) + b2


if __name__ == "__main__":
    key = jax.random.PRNGKey(0)
    kx, k1, k2, k3, k4 = jax.random.split(key, 5)

    N, S, D = 2, 8, 32            # ffn_num = 32 -> hidden H = 128
    H = 4 * D

    X = jax.random.normal(kx, (N, S, D), dtype=jnp.float32)

    # PyTorch nn.Linear parameter layout: weight (out, in), bias (out,).
    w1 = jax.random.normal(k1, (H, D), dtype=jnp.float32) * (1.0 / D) ** 0.5
    b1 = jax.random.normal(k2, (H,), dtype=jnp.float32) * 0.1
    w2 = jax.random.normal(k3, (D, H), dtype=jnp.float32) * (1.0 / H) ** 0.5
    b2 = jax.random.normal(k4, (D,), dtype=jnp.float32) * 0.1

    out = jax.block_until_ready(position_wise_ffn(X, w1, b1, w2, b2))
    ref = jax.block_until_ready(reference(X, w1, b1, w2, b2))

    assert out.shape == (N, S, D)
    assert out.dtype == X.dtype
    assert jnp.allclose(out, ref, atol=1e-4, rtol=1e-4), "mismatch vs reference"
    print("KERNEL_OK")
</pallas_src>

<mosaic_0001>
module attributes {stable_mosaic.version = 11 : i64} {
  func.func @ffn_kernel(%arg0: i32, %arg1: i32, %arg2: memref<8x32xf32, #tpu.memory_space<vmem>>, %arg3: memref<128x32xf32, #tpu.memory_space<vmem>>, %arg4: memref<1x128xf32, #tpu.memory_space<vmem>>, %arg5: memref<32x128xf32, #tpu.memory_space<vmem>>, %arg6: memref<1x32xf32, #tpu.memory_space<vmem>>, %arg7: memref<8x32xf32, #tpu.memory_space<vmem>>, %arg8: memref<8x32xf32, #tpu.memory_space<vmem>>) attributes {dimension_semantics = [#tpu.dimension_semantics<parallel>, #tpu.dimension_semantics<arbitrary>], iteration_bounds = array<i64: 2, 1>, scalar_prefetch = 0 : i64, scratch_operands = 1 : i64, tpu.core_type = #tpu.core_type<tc>, window_params = [{transform_indices = @transform_0, window_bounds = array<i64: 8, 32>}, {transform_indices = @transform_1, window_bounds = array<i64: 128, 32>}, {transform_indices = @transform_2, window_bounds = array<i64: 1, 128>}, {transform_indices = @transform_3, window_bounds = array<i64: 32, 128>}, {pipeline_mode = #tpu.pipeline_mode<synchronous>, transform_indices = @transform_4, window_bounds = array<i64: 1, 32>}, {transform_indices = @transform_5, window_bounds = array<i64: 8, 32>}]} {
    %c0_i32 = arith.constant 0 : i32
    %0 = arith.cmpi eq, %arg1, %c0_i32 : i32
    %1 = arith.extui %0 : i1 to i32
    %c0_i32_0 = arith.constant 0 : i32
    %2 = arith.cmpi ne, %1, %c0_i32_0 : i32
    scf.if %2 {
      %cst_16 = arith.constant 0.000000e+00 : f32
      %19 = vector.broadcast %cst_16 : f32 to vector<8x32xf32>
      %c0_17 = arith.constant 0 : index
      %c0_18 = arith.constant 0 : index
      %20 = vector.load %arg8[%c0_17, %c0_18] : memref<8x32xf32, #tpu.memory_space<vmem>>, vector<8x32xf32>
      tpu.vector_store %arg8[%c0_17, %c0_18], %19 {strides = array<i32>} : memref<8x32xf32, #tpu.memory_space<vmem>>, vector<8x32xf32>,
    } else {
    }
    %c0 = arith.constant 0 : index
    %c0_1 = arith.constant 0 : index
    %3 = vector.load %arg2[%c0, %c0_1] : memref<8x32xf32, #tpu.memory_space<vmem>>, vector<8x32xf32>
    %c0_2 = arith.constant 0 : index
    %c0_3 = arith.constant 0 : index
    %4 = vector.load %arg3[%c0_2, %c0_3] : memref<128x32xf32, #tpu.memory_space<vmem>>, vector<128x32xf32>
    %cst = arith.constant dense<0.000000e+00> : vector<8x128xf32>
    %5 = tpu.matmul %3, %4, %cst {dimension_numbers = #tpu.dot_dimension_numbers<[1], [1], [0], [0], [0, 0, 1, 0], [], []>} : vector<8x32xf32>, vector<128x32xf32>, vector<8x128xf32> -> vector<8x128xf32>
    %c0_4 = arith.constant 0 : index
    %c0_5 = arith.constant 0 : index
    %6 = vector.load %arg4[%c0_4, %c0_5] : memref<1x128xf32, #tpu.memory_space<vmem>>, vector<1x128xf32>
    %7 = vector.broadcast %6 : vector<1x128xf32> to vector<8x128xf32>
    %8 = arith.addf %5, %7 : vector<8x128xf32>
    %cst_6 = arith.constant 0.000000e+00 : f32
    %9 = vector.broadcast %cst_6 : f32 to vector<8x128xf32>
    %10 = arith.maximumf %8, %9 : vector<8x128xf32>
    %c0_7 = arith.constant 0 : index
    %c0_8 = arith.constant 0 : index
    %11 = vector.load %arg8[%c0_7, %c0_8] : memref<8x32xf32, #tpu.memory_space<vmem>>, vector<8x32xf32>
    %c0_9 = arith.constant 0 : index
    %c0_10 = arith.constant 0 : index
    %12 = vector.load %arg5[%c0_9, %c0_10] : memref<32x128xf32, #tpu.memory_space<vmem>>, vector<32x128xf32>
    %cst_11 = arith.constant dense<0.000000e+00> : vector<8x32xf32>
    %13 = tpu.matmul %10, %12, %cst_11 {dimension_numbers = #tpu.dot_dimension_numbers<[1], [1], [0], [0], [0, 0, 1, 0], [], []>} : vector<8x128xf32>, vector<32x128xf32>, vector<8x32xf32> -> vector<8x32xf32>
    %14 = arith.addf %11, %13 : vector<8x32xf32>
    %c0_12 = arith.constant 0 : index
    %c0_13 = arith.constant 0 : index
    %15 = vector.load %arg8[%c0_12, %c0_13] : memref<8x32xf32, #tpu.memory_space<vmem>>, vector<8x32xf32>
    tpu.vector_store %arg8[%c0_12, %c0_13], %14 {strides = array<i32>} : memref<8x32xf32, #tpu.memory_space<vmem>>, vector<8x32xf32>,
    %c0_i32_14 = arith.constant 0 : i32
    %16 = arith.cmpi eq, %arg1, %c0_i32_14 : i32
    %17 = arith.extui %16 : i1 to i32
    %c0_i32_15 = arith.constant 0 : i32
    %18 = arith.cmpi ne, %17, %c0_i32_15 : i32
    scf.if %18 {
      %c0_16 = arith.constant 0 : index
      %c0_17 = arith.constant 0 : index
      %19 = vector.load %arg8[%c0_16, %c0_17] : memref<8x32xf32, #tpu.memory_space<vmem>>, vector<8x32xf32>
      %c0_18 = arith.constant 0 : index
      %c0_19 = arith.constant 0 : index
      %20 = vector.load %arg6[%c0_18, %c0_19] : memref<1x32xf32, #tpu.memory_space<vmem>>, vector<1x32xf32>
      %21 = vector.broadcast %20 : vector<1x32xf32> to vector<8x32xf32>
      %22 = arith.addf %19, %21 : vector<8x32xf32>
      %c0_20 = arith.constant 0 : index
      %c0_21 = arith.constant 0 : index
      %23 = vector.load %arg7[%c0_20, %c0_21] : memref<8x32xf32, #tpu.memory_space<vmem>>, vector<8x32xf32>
      tpu.vector_store %arg7[%c0_20, %c0_21], %22 {strides = array<i32>} : memref<8x32xf32, #tpu.memory_space<vmem>>, vector<8x32xf32>,
    } else {
    }
    return
  }
  func.func @transform_0(%arg0: i32, %arg1: i32) -> (i32, i32) {
    %c0_i32 = arith.constant 0 : i32
    %c0_i32_0 = arith.constant 0 : i32
    return %arg0, %c0_i32 : i32, i32
  }
  func.func @transform_1(%arg0: i32, %arg1: i32) -> (i32, i32) {
    %c0_i32 = arith.constant 0 : i32
    %c0_i32_0 = arith.constant 0 : i32
    return %arg1, %c0_i32 : i32, i32
  }
  func.func @transform_2(%arg0: i32, %arg1: i32) -> (i32, i32) {
    %c0_i32 = arith.constant 0 : i32
    %c0_i32_0 = arith.constant 0 : i32
    return %c0_i32, %arg1 : i32, i32
  }
  func.func @transform_3(%arg0: i32, %arg1: i32) -> (i32, i32) {
    %c0_i32 = arith.constant 0 : i32
    %c0_i32_0 = arith.constant 0 : i32
    return %c0_i32, %arg1 : i32, i32
  }
  func.func @transform_4(%arg0: i32, %arg1: i32) -> (i32, i32) {
    %c0_i32 = arith.constant 0 : i32
    %c0_i32_0 = arith.constant 0 : i32
    %c0_i32_1 = arith.constant 0 : i32
    return %c0_i32, %c0_i32_0 : i32, i32
  }
  func.func @transform_5(%arg0: i32, %arg1: i32) -> (i32, i32) {
    %c0_i32 = arith.constant 0 : i32
    %c0_i32_0 = arith.constant 0 : i32
    return %arg0, %c0_i32 : i32, i32
  }
}

</mosaic_0001>

<llo_original>
// kernel: tpu_custom_call.1
$region0: #{tpu_custom_call.1}
  #allocation0 [shape = 'u32[]', space=smem, size = 0x4, offset = 0x4, fixed_abs, tag = 'smem constant byte address 0x4 - core index']
  #allocation1 [shape = 'u32[72,128]{1,0:T(1,128)}', space=vmem, size = 0x9000, scoped, tag = 'internal scratch']
  #allocation2 [shape = 'f32[8,32]{1,0:T(8,128)}', space=vmem, size = 0x1000, scoped, tag = 'scratch operand']
  %s0 = inlined_call_operand.vmem [shape: f32[16,32], index: 0, kind: input, shape index: {}]
  %s1 = inlined_call_operand.vmem [shape: f32[128,32], index: 1, kind: input, shape index: {}]
  %s2 = inlined_call_operand.vmem [shape: f32[1,128], index: 2, kind: input, shape index: {}]
  %s3 = inlined_call_operand.vmem [shape: f32[32,128], index: 3, kind: input, shape index: {}]
  %s4 = inlined_call_operand.vmem [shape: f32[1,32], index: 4, kind: input, shape index: {}]
  %s5 = inlined_call_operand.hbm [shape: f32[16,32], index: 5, kind: output, shape index: {}]
  %s6 = sld [smem:[#allocation0]]
  $region61: #{tpu_custom_call.1} parent=0
    _
  %s8 = ssub.s32 1, %s6
  %s9 = scalar_select 0, %s8, %s6
  $region1: #{tpu_custom_call.1} parent=0
    #allocation3 [shape = 'u8[8192]{0}', space=vmem, size = 0x2000, scoped, tag = 'output window, operand 0']
    #allocation4 [shape = 's32[2]{0}', space=sflag, size = 0x8, scoped, tag = 'scoped memory for tpu_custom_call.1']
    %10 = vsyncpa [#allocation4], 0
    %s11 = scalar_lea.sflag [#allocation4], 1
    %12 = vsyncpa %s11, 0
    loop: start=0, step=1, limit=4
    $region2: #{tpu_custom_call.1} parent=1 // loop_pre_header
      _
    $region3: #{tpu_custom_call.1} parent=1 // loop_header
      %s14 = sphi 0, %s18
      %p15 = scmp.ge.s32.totalorder %s14, 4
      %s21 = sphi 0, %s33
      %s22 = sphi 0, %s29
      %s23 = sphi 0, %s21
      %s24 = sphi 0, %s22
      %s25 = sphi 0, %s23
      %s26 = sphi 0, %s24
      %s36 = sphi 0, %s38
      %s39 = sphi 0, %s36
      %s40 = sphi 0, %s39
      %s56 = sphi 0, %s40
      %s62 = sphi 0, %s64
      %s65 = sphi 0, %s62
      %s66 = sphi 0, %s65
      %s82 = sphi 0, %s66
      %s88 = sphi 0, %s90
      %s91 = sphi 0, %s88
      %s92 = sphi 0, %s91
      %s108 = sphi 0, %s92
      %s114 = sphi 0, %s116
      %s117 = sphi 0, %s114
      %s118 = sphi 0, %s117
      %s134 = sphi 0, %s118
      %s138 = sphi 0, %s138
      %s140 = sphi 0, %s138
      %s141 = sphi 0, %s140
      %s155 = sphi 0, %s141
      %s161 = sphi 0, %s163
      %s164 = sphi 0, %s161
      %s165 = sphi 0, %s164
      %s181 = sphi 0, %s165
    $region4: #{tpu_custom_call.1} parent=1 // loop_header_branch
      %17 = sbr.rel (%p15) target = $region8
    $region5: #{tpu_custom_call.1} parent=1 // loop_body
      %s19 = ssub.s32 %s14, 1
      %s20 = ssub.s32 %s14, 2
      %s27 = sadd.s32 1, %s22
      %p28 = scmp.ge.s32.totalorder %s27, 1
      %s29 = scalar_select %p28, 0, %s27
      %s30 = sadd.s32 1, %s21
      %s31 = scalar_select %p28, %s30, %s21
      %p32 = scmp.ge.s32.totalorder %s31, 2
      %s33 = scalar_select %p32, 0, %s31
      %s34 = ssub.s32 %s21, %s33
      %p35 = scmp.eq.s32.totalorder %s34, 0
      %s37 = sadd.s32 %s36, 1
      %s38 = scalar_select %p35, %s36, %s37
      %p41 = pneg %p35
      %p42 = scmp.eq.s32.totalorder %s14, 1
      %p43 = por %p41, %p42
      %p44 = scmp.ne.s32.totalorder %s36, %s39
      %p45 = scmp.eq.s32.totalorder %s14, 0
      %p46 = por %p44, %p45
      %p47 = scmp.ne.s32.totalorder %s36, %s39
      %p48 = scmp.eq.s32.totalorder %s19, 1
      %p49 = por %p47, %p48
      %p50 = scmp.ne.s32.totalorder %s39, %s40
      %p51 = scmp.eq.s32.totalorder %s19, 0
      %p52 = por %p50, %p51
      %p53 = scmp.ne.s32.totalorder %s39, %s40
      %p54 = scmp.eq.s32.totalorder %s20, 1
      %p55 = por %p53, %p54
      %p57 = scmp.ne.s32.totalorder %s40, %s56
      %p58 = scmp.eq.s32.totalorder %s20, 0
      %p59 = por %p57, %p58
      %s60 = ssub.s32 %s22, %s29
      %p61 = scmp.eq.s32.totalorder %s60, 0
      %s63 = sadd.s32 %s62, 1
      %s64 = scalar_select %p61, %s62, %s63
      %p67 = pneg %p61
      %p68 = scmp.eq.s32.totalorder %s14, 1
      %p69 = por %p67, %p68
      %p70 = scmp.ne.s32.totalorder %s62, %s65
      %p71 = scmp.eq.s32.totalorder %s14, 0
      %p72 = por %p70, %p71
      %p73 = scmp.ne.s32.totalorder %s62, %s65
      %p74 = scmp.eq.s32.totalorder %s19, 1
      %p75 = por %p73, %p74
      %p76 = scmp.ne.s32.totalorder %s65, %s66
      %p77 = scmp.eq.s32.totalorder %s19, 0
      %p78 = por %p76, %p77
      %p79 = scmp.ne.s32.totalorder %s65, %s66
      %p80 = scmp.eq.s32.totalorder %s20, 1
      %p81 = por %p79, %p80
      %p83 = scmp.ne.s32.totalorder %s66, %s82
      %p84 = scmp.eq.s32.totalorder %s20, 0
      %p85 = por %p83, %p84
      %s86 = ssub.s32 %s22, %s29
      %p87 = scmp.eq.s32.totalorder %s86, 0
      %s89 = sadd.s32 %s88, 1
      %s90 = scalar_select %p87, %s88, %s89
      %p93 = pneg %p87
      %p94 = scmp.eq.s32.totalorder %s14, 1
      %p95 = por %p93, %p94
      %p96 = scmp.ne.s32.totalorder %s88, %s91
      %p97 = scmp.eq.s32.totalorder %s14, 0
      %p98 = por %p96, %p97
      %p99 = scmp.ne.s32.totalorder %s88, %s91
      %p100 = scmp.eq.s32.totalorder %s19, 1
      %p101 = por %p99, %p100
      %p102 = scmp.ne.s32.totalorder %s91, %s92
      %p103 = scmp.eq.s32.totalorder %s19, 0
      %p104 = por %p102, %p103
      %p105 = scmp.ne.s32.totalorder %s91, %s92
      %p106 = scmp.eq.s32.totalorder %s20, 1
      %p107 = por %p105, %p106
      %p109 = scmp.ne.s32.totalorder %s92, %s108
      %p110 = scmp.eq.s32.totalorder %s20, 0
      %p111 = por %p109, %p110
      %s112 = ssub.s32 %s22, %s29
      %p113 = scmp.eq.s32.totalorder %s112, 0
      %s115 = sadd.s32 %s114, 1
      %s116 = scalar_select %p113, %s114, %s115
      %p119 = pneg %p113
      %p120 = scmp.eq.s32.totalorder %s14, 1
      %p121 = por %p119, %p120
      %p122 = scmp.ne.s32.totalorder %s114, %s117
      %p123 = scmp.eq.s32.totalorder %s14, 0
      %p124 = por %p122, %p123
      %p125 = scmp.ne.s32.totalorder %s114, %s117
      %p126 = scmp.eq.s32.totalorder %s19, 1
      %p127 = por %p125, %p126
      %p128 = scmp.ne.s32.totalorder %s117, %s118
      %p129 = scmp.eq.s32.totalorder %s19, 0
      %p130 = por %p128, %p129
      %p131 = scmp.ne.s32.totalorder %s117, %s118
      %p132 = scmp.eq.s32.totalorder %s20, 1
      %p133 = por %p131, %p132
      %p135 = scmp.ne.s32.totalorder %s118, %s134
      %p136 = scmp.eq.s32.totalorder %s20, 0
      %p137 = por %p135, %p136
      %s139 = sadd.s32 %s138, 1
      %p142 = scmp.eq.s32.totalorder %s14, 1
      %p143 = scmp.ne.s32.totalorder %s138, %s140
      %p144 = scmp.eq.s32.totalorder %s14, 0
      %p145 = por %p143, %p144
      %p146 = scmp.ne.s32.totalorder %s138, %s140
      %p147 = scmp.eq.s32.totalorder %s19, 1
      %p148 = por %p146, %p147
      %p149 = scmp.ne.s32.totalorder %s140, %s141
      %p150 = scmp.eq.s32.totalorder %s19, 0
      %p151 = por %p149, %p150
      %p152 = scmp.ne.s32.totalorder %s140, %s141
      %p153 = scmp.eq.s32.totalorder %s20, 1
      %p154 = por %p152, %p153
      %p156 = scmp.ne.s32.totalorder %s141, %s155
      %p157 = scmp.eq.s32.totalorder %s20, 0
      %p158 = por %p156, %p157
      %s159 = ssub.s32 %s21, %s33
      %p160 = scmp.eq.s32.totalorder %s159, 0
      %s162 = sadd.s32 %s161, 1
      %s163 = scalar_select %p160, %s161, %s162
      %p166 = pneg %p160
      %p167 = scmp.eq.s32.totalorder %s14, 1
      %p168 = por %p166, %p167
      %p169 = scmp.ne.s32.totalorder %s161, %s164
      %p170 = scmp.eq.s32.totalorder %s14, 0
      %p171 = por %p169, %p170
      %p172 = scmp.ne.s32.totalorder %s161, %s164
      %p173 = scmp.eq.s32.totalorder %s19, 1
      %p174 = por %p172, %p173
      %p175 = scmp.ne.s32.totalorder %s164, %s165
      %p176 = scmp.eq.s32.totalorder %s19, 0
      %p177 = por %p175, %p176
      %p178 = scmp.ne.s32.totalorder %s164, %s165
      %p179 = scmp.eq.s32.totalorder %s20, 1
      %p180 = por %p178, %p179
      %p182 = scmp.ne.s32.totalorder %s165, %s181
      %p183 = scmp.eq.s32.totalorder %s20, 0
      %p184 = por %p182, %p183
      %p185 = scmp.le.s32.totalorder 1, %s14
      %p186 = scmp.lt.s32.totalorder %s14, 3
      %p187 = pnand %p185, %p186
      %p188 = pneg %p187
      // Predicated region
      $region9: #{tpu_custom_call.1} parent=5 // pred_check
        _
      $region10: #{tpu_custom_call.1} parent=5 // pred_check_branch
        %190 = sbr.rel (%p187) target = $region12
      $region11: #{tpu_custom_call.1} parent=5 // pred_region
        %s191 = ssub.s32 %s14, 1
        // Predicated region
        $region13: #{tpu_custom_call.1} parent=11 // pred_check
          %p192 = pneg %p78
        $region14: #{tpu_custom_call.1} parent=11 // pred_check_branch
          %194 = sbr.rel (%p192) target = $region16
        $region15: #{tpu_custom_call.1} parent=11 // pred_region
          %s195 = smul.u32 16, %s24
          %p196 = scmp.lt.s32.totalorder %s195, 15
          %s197 = scalar_select %p196, %s195, 15
          %s198 = smul.addr %s197, 8
          %s199 = scalar_lea.vmem %s1, %s198
          %s200 = smul.u32 16, %s24
        $region16: #{tpu_custom_call.1} parent=11 // pred_fallthru
          _
        // Predicated region
        $region17: #{tpu_custom_call.1} parent=11 // pred_check
          %p201 = pneg %p104
        $region18: #{tpu_custom_call.1} parent=11 // pred_check_branch
          %203 = sbr.rel (%p201) target = $region20
        $region19: #{tpu_custom_call.1} parent=11 // pred_region
          %p204 = scmp.lt.s32.totalorder %s24, 0
          %s205 = scalar_select %p204, %s24, 0
          %s206 = scalar_lea.vmem %s2, %s205
        $region20: #{tpu_custom_call.1} parent=11 // pred_fallthru
          _
        // Predicated region
        $region21: #{tpu_custom_call.1} parent=11 // pred_check
          %p207 = pneg %p130
        $region22: #{tpu_custom_call.1} parent=11 // pred_check_branch
          %209 = sbr.rel (%p207) target = $region24
        $region23: #{tpu_custom_call.1} parent=11 // pred_region
          %p210 = scmp.lt.s32.totalorder %s24, 0
          %s211 = scalar_select %p210, %s24, 0
          %s212 = smul.addr %s211, 8
          %s213 = scalar_lea.vmem %s3, %s212
        $region24: #{tpu_custom_call.1} parent=11 // pred_fallthru
          _
        // Predicated region
        $region25: #{tpu_custom_call.1} parent=11 // pred_check
          %p214 = pneg %p151
        $region26: #{tpu_custom_call.1} parent=11 // pred_check_branch
          %216 = sbr.rel (%p214) target = $region28
        $region27: #{tpu_custom_call.1} parent=11 // pred_region
          _
        $region28: #{tpu_custom_call.1} parent=11 // pred_fallthru
          _
      $region12: #{tpu_custom_call.1} parent=5 // pred_fallthru
        _
      %p217 = scmp.lt.s32.totalorder %s14, 2
      // Predicated region
      $region29: #{tpu_custom_call.1} parent=5 // pred_check
        %p218 = pneg %p217
      $region30: #{tpu_custom_call.1} parent=5 // pred_check_branch
        %220 = sbr.rel (%p218) target = $region32
      $region31: #{tpu_custom_call.1} parent=5 // pred_region
        // Predicated region
        $region33: #{tpu_custom_call.1} parent=31 // pred_check
          %p221 = pneg %p46
        $region34: #{tpu_custom_call.1} parent=31 // pred_check_branch
          %223 = sbr.rel (%p221) target = $region36
        $region35: #{tpu_custom_call.1} parent=31 // pred_region
          %p224 = scmp.lt.s32.totalorder %s21, 1
          %s225 = scalar_select %p224, %s21, 1
          %s226 = smul.addr %s225, 8
          %s227 = scalar_lea.vmem %s0, %s226
        $region36: #{tpu_custom_call.1} parent=31 // pred_fallthru
          _
      $region32: #{tpu_custom_call.1} parent=5 // pred_fallthru
        _
      %p228 = scmp.le.s32.totalorder 1, %s14
      %p229 = scmp.lt.s32.totalorder %s14, 3
      %p230 = pnand %p228, %p229
      %p231 = pneg %p230
      // Predicated region
      $region37: #{tpu_custom_call.1} parent=5 // pred_check
        _
      $region38: #{tpu_custom_call.1} parent=5 // pred_check_branch
        %233 = sbr.rel (%p230) target = $region40
      $region39: #{tpu_custom_call.1} parent=5 // pred_region
        %s234 = ssub.s32 %s14, 1
        %p235 = scmp.lt.s32.totalorder %s23, 1
        %s236 = scalar_select %p235, %s23, 1
        %s237 = smul.addr %s236, 8
        %s238 = scalar_lea.vmem %s0, %s237
        %p239 = pneg %p52
        %p240 = pneg %p49
        %s241 = smul.u32 16, %s24
        %p242 = scmp.lt.s32.totalorder %s241, 15
        %s243 = scalar_select %p242, %s241, 15
        %s244 = smul.addr %s243, 8
        %s245 = scalar_lea.vmem %s1, %s244
        %p246 = pneg %p78
        %p247 = pneg %p75
        %p248 = scmp.lt.s32.totalorder %s24, 0
        %s249 = scalar_select %p248, %s24, 0
        %s250 = scalar_lea.vmem %s2, %s249
        %p251 = pneg %p104
        %p252 = pneg %p101
        %p253 = scmp.lt.s32.totalorder %s24, 0
        %s254 = scalar_select %p253, %s24, 0
        %s255 = smul.addr %s254, 8
        %s256 = scalar_lea.vmem %s3, %s255
        %p257 = pneg %p130
        %p258 = pneg %p127
        %p259 = pneg %p151
        %p260 = pneg %p148
        %p261 = pneg %p177
        %p262 = pneg %p174
        %s263 = sand.u32 %s164, 1
        %s264 = scalar_lea.sflag [#allocation4], %s263
        %s265 = sand.u32 %s164, 1
        %s266 = smul.addr %s265, 8
        %s267 = scalar_lea.vmem [#allocation3], %s266
        %p268 = scmp.lt.s32.totalorder %s23, 1
        %s269 = scalar_select %p268, %s23, 1
        %s270 = smul.addr %s269, 8
        %s271 = scalar_lea.vmem %s0, %s270
        %s272 = smul.u32 16, %s24
        %p273 = scmp.lt.s32.totalorder %s272, 15
        %s274 = scalar_select %p273, %s272, 15
        %s275 = smul.addr %s274, 8
        %s276 = scalar_lea.vmem %s1, %s275
        %s277 = smul.u32 16, %s24
        %p278 = scmp.lt.s32.totalorder %s24, 0
        %s279 = scalar_select %p278, %s24, 0
        %s280 = scalar_lea.vmem %s2, %s279
        %p281 = scmp.lt.s32.totalorder %s24, 0
        %s282 = scalar_select %p281, %s24, 0
        %s283 = smul.addr %s282, 8
        %s284 = scalar_lea.vmem %s3, %s283
        %p285 = scmp.eq.s32.totalorder %s24, 0
        // Predicated region
        $region41: #{tpu_custom_call.1} parent=39 // pred_check
          %p286 = pneg %p285
        $region42: #{tpu_custom_call.1} parent=39 // pred_check_branch
          %288 = sbr.rel (%p286) target = $region44
        $region43: #{tpu_custom_call.1} parent=39 // pred_region
          %vm289 = vcmask 261120
          %290 = vst.msk [vmem:[#allocation2] sm:$0xff] %vm289, 0.0
        $region44: #{tpu_custom_call.1} parent=39 // pred_fallthru
          _
        %v291 = vld [vmem:[%s271] sm:$0xff]
        %v292 = vld [vmem:[%s276] sm:$0xff]
        %v293 = vld [vmem:[%s276 + $0x8] sm:$0xff]
        %v294 = vld [vmem:[%s276 + $0x10] sm:$0xff]
        %v295 = vld [vmem:[%s276 + $0x18] sm:$0xff]
        %v296 = vld [vmem:[%s276 + $0x20] sm:$0xff]
        %v297 = vld [vmem:[%s276 + $0x28] sm:$0xff]
        %v298 = vld [vmem:[%s276 + $0x30] sm:$0xff]
        %v299 = vld [vmem:[%s276 + $0x38] sm:$0xff]
        %v300 = vld [vmem:[%s276 + $0x40] sm:$0xff]
        %v301 = vld [vmem:[%s276 + $0x48] sm:$0xff]
        %v302 = vld [vmem:[%s276 + $0x50] sm:$0xff]
        %v303 = vld [vmem:[%s276 + $0x58] sm:$0xff]
        %v304 = vld [vmem:[%s276 + $0x60] sm:$0xff]
        %v305 = vld [vmem:[%s276 + $0x68] sm:$0xff]
        %v306 = vld [vmem:[%s276 + $0x70] sm:$0xff]
        %v307 = vld [vmem:[%s276 + $0x78] sm:$0xff]
        %v308 = vld [vmem:[%s280] sm:$0x1]
        %v310 = vperm.slane %v308, 0
        %vm312 = vcmask 261120
        %v314 = vsel %vm312, %v291, 0
        %v317 = vsel %vm312, %v292, 0
        %v320 = vsel %vm312, %v293, 0
        %v323 = vsel %vm312, %v294, 0
        %v326 = vsel %vm312, %v295, 0
        %v329 = vsel %vm312, %v296, 0
        %v332 = vsel %vm312, %v297, 0
        %v335 = vsel %vm312, %v298, 0
        %v338 = vsel %vm312, %v299, 0
        %v341 = vsel %vm312, %v300, 0
        %v344 = vsel %vm312, %v301, 0
        %v347 = vsel %vm312, %v302, 0
        %v350 = vsel %vm312, %v303, 0
        %v353 = vsel %vm312, %v304, 0
        %v356 = vsel %vm312, %v305, 0
        %v359 = vsel %vm312, %v306, 0
        %v362 = vsel %vm312, %v307, 0
        %364 = vmatpush.xpose.msra.mxu0 %v362
        %365 = vmatpush.xpose.msra.mxu0 %v359
        %366 = vmatpush.xpose.msra.mxu0 %v356
        %367 = vmatpush.xpose.msra.mxu0 %v353
        %368 = vmatpush.xpose.msra.mxu0 %v350
        %369 = vmatpush.xpose.msra.mxu0 %v347
        %370 = vmatpush.xpose.msra.mxu0 %v344
        %371 = vmatpush.xpose.msra.mxu0 %v341
        %372 = vmatpush.xpose.msra.mxu0 %v338
        %373 = vmatpush.xpose.msra.mxu0 %v335
        %374 = vmatpush.xpose.msra.mxu0 %v332
        %375 = vmatpush.xpose.msra.mxu0 %v329
        %376 = vmatpush.xpose.msra.mxu0 %v326
        %377 = vmatpush.xpose.msra.mxu0 %v323
        %378 = vmatpush.xpose.msra.mxu0 %v320
        %379 = vmatpush.xpose.msra.mxu0 %v317
        %380 = vmatmul.f32.gmra.mxu0 %v314
        %v381 = vpop.f32.mrf.mxu0
        %v382 = vadd.f32 %v310, %v381
        %383 = vdwg.mxu0
        %v384 = vmax.f32 %v382, 0.0
        %v385 = vld [vmem:[#allocation2] sm:$0xff]
        %v386 = vld [vmem:[%s284] sm:$0xff]
        %v387 = vld [vmem:[%s284 + $0x8] sm:$0xff]
        %v388 = vld [vmem:[%s284 + $0x10] sm:$0xff]
        %v389 = vld [vmem:[%s284 + $0x18] sm:$0xff]
        %390 = vmatpush.xpose.msra.mxu0 0.0
        %391 = vmatpush.xpose.msra.mxu0 0.0
        %392 = vmatpush.xpose.msra.mxu0 0.0
        %393 = vmatpush.xpose.msra.mxu0 0.0
        %394 = vmatpush.xpose.msra.mxu0 0.0
        %395 = vmatpush.xpose.msra.mxu0 0.0
        %396 = vmatpush.xpose.msra.mxu0 0.0
        %397 = vmatpush.xpose.msra.mxu0 0.0
        %398 = vmatpush.xpose.msra.mxu0 0.0
        %399 = vmatpush.xpose.msra.mxu0 0.0
        %400 = vmatpush.xpose.msra.mxu0 0.0
        %401 = vmatpush.xpose.msra.mxu0 0.0
        %402 = vmatpush.xpose.msra.mxu0 %v389
        %403 = vmatpush.xpose.msra.mxu0 %v388
        %404 = vmatpush.xpose.msra.mxu0 %v387
        %405 = vmatpush.xpose.msra.mxu0 %v386
        %406 = vmatmul.f32.gmra.mxu0 %v384
        %v407 = vpop.f32.mrf.mxu0
        %v408 = vadd.f32 0.0, %v407
        %409 = vdwg.mxu0
        %v410 = vadd.f32 %v385, %v408
        %411 = vst.msk [vmem:[#allocation2] sm:$0xff] %vm312, %v410
        // Predicated region
        $region45: #{tpu_custom_call.1} parent=39 // pred_check
          %p412 = pneg %p285
        $region46: #{tpu_custom_call.1} parent=39 // pred_check_branch
          %414 = sbr.rel (%p412) target = $region48
        $region47: #{tpu_custom_call.1} parent=39 // pred_region
          %v415 = vld [vmem:[#allocation2] sm:$0xff]
          %v416 = vld [vmem:[%s4] sm:$0x1]
          %v418 = vperm.slane %v416, 0
          %v420 = vadd.f32 %v415, %v418
          %421 = vst.msk [vmem:[%s267] sm:$0xff] %vm312, %v420
        $region48: #{tpu_custom_call.1} parent=39 // pred_fallthru
          _
        %s422 = sand.u32 %s164, 1
        %s423 = scalar_lea.sflag [#allocation4], %s422
        %s424 = sand.u32 %s164, 1
        %s425 = smul.addr %s424, 8
        %s426 = scalar_lea.vmem [#allocation3], %s425
        // Predicated region
        $region49: #{tpu_custom_call.1} parent=39 // pred_check
          %p427 = pneg %p174
        $region50: #{tpu_custom_call.1} parent=39 // pred_check_branch
          %429 = sbr.rel (%p427) target = $region52
        $region51: #{tpu_custom_call.1} parent=39 // pred_region
          %431 = vsyncadd %s423, 0
          %s432 = smul.addr %s23, 8
          %s433 = scalar_lea.hbm %s5, %s432
          %s435 = sshll.u32 %s426, 4
          %s436 = int_to_ptr.vmem [resolvable:$true] %s435
          %s437 = sshll.u32 %s433, 4
          %s438 = int_to_ptr.hbm [resolvable:$true] %s437
          %440 = dma.vmem_to_hbm [thread:$0]  %s436, 128, %s438, %s423
        $region52: #{tpu_custom_call.1} parent=39 // pred_fallthru
          _
      $region40: #{tpu_custom_call.1} parent=5 // pred_fallthru
        _
      %p441 = scmp.le.s32.totalorder 2, %s14
      // Predicated region
      $region53: #{tpu_custom_call.1} parent=5 // pred_check
        %p442 = pneg %p441
      $region54: #{tpu_custom_call.1} parent=5 // pred_check_branch
        %444 = sbr.rel (%p442) target = $region56
      $region55: #{tpu_custom_call.1} parent=5 // pred_region
        %s445 = ssub.s32 %s14, 2
        // Predicated region
        $region57: #{tpu_custom_call.1} parent=55 // pred_check
          %p446 = pneg %p180
        $region58: #{tpu_custom_call.1} parent=55 // pred_check_branch
          %448 = sbr.rel (%p446) target = $region60
        $region59: #{tpu_custom_call.1} parent=55 // pred_region
          %s449 = sand.u32 %s165, 1
          %s450 = scalar_lea.sflag [#allocation4], %s449
          %s451 = sand.u32 %s165, 1
          %s452 = smul.addr %s451, 8
          %s453 = scalar_lea.vmem [#allocation3], %s452
          %455 = dma.done %s450, 128
        $region60: #{tpu_custom_call.1} parent=55 // pred_fallthru
          _
      $region56: #{tpu_custom_call.1} parent=5 // pred_fallthru
        _
    $region6: #{tpu_custom_call.1} parent=1 // loop_footer
      %s18 = sadd.s32 1, %s14
    $region7: #{tpu_custom_call.1} parent=1 // loop_footer_branch
      %13 = sbr.rel target = $region3
    $region8: #{tpu_custom_call.1} parent=1 // loop_exit
      _
    %456 = vsyncpa [#allocation4], 1
    %s457 = scalar_lea.sflag [#allocation4], 1
    %458 = vsyncpa %s457, 1

</llo_original>
